<compile_context>
chip_gen: v5e
topology: v5e:2x2
jax: 0.10.0
libtpu: 0.0.40
codegen_flags: <defaults>
</compile_context>

<pallas_src>
import functools
import math

import jax
import jax.numpy as jnp
from jax.experimental import pallas as pl
from jax.experimental.pallas import tpu as pltpu

LANE = 128   # TPU lane width
SUBLANE = 8  # TPU sublane width (f32)


def _round_up(n, m):
    return ((n + m - 1) // m) * m


def _cdiv(a, b):
    return (a + b - 1) // b


def _choose_row_tiling(m):
    """Pick (tm, num_blocks) that minimizes padded-row waste.

    Small/medium M -> single block (waste < 8 rows).  Large M -> an even number
    of balanced blocks (<= ~1024 rows each): even so the 'parallel' grid axis
    shards evenly across v7x's two TensorCores, large so the ~0.35us/step
    pipeline overhead is amortized.
    """
    m8 = _round_up(max(m, 1), SUBLANE)
    if m8 <= 512:
        return m8, 1
    num_blocks = max(2, _cdiv(m8, 1024))
    if num_blocks % 2:
        num_blocks += 1
    tm = _round_up(_cdiv(m8, num_blocks), SUBLANE)
    return tm, num_blocks


def _fused_mlp_kernel(*refs, num_layers, sigmoid_output, compute_dtype):
    # refs = (x_ref, w0, b0, w1, b1, ..., w_{L-1}, b_{L-1}, o_ref)
    # x_ref: (tm, K0)  [K0 = true input_dim, unpadded]
    # w_i:   (K_i, N_i_pad) in compute_dtype, b_i: (1, N_i_pad) f32
    # o_ref: (tm, N_L_pad) f32
    x_ref = refs[0]
    o_ref = refs[-1]
    params = refs[1:-1]

    y = x_ref[...].astype(jnp.float32)
    for i in range(num_layers):
        w = params[2 * i][...]
        b = params[2 * i + 1][...]
        # MXU matmul: operands in compute_dtype (f32 or bf16), f32 accumulate.
        y = jnp.dot(y.astype(compute_dtype), w,
                    preferred_element_type=jnp.float32) + b
        if i < num_layers - 1:
            y = jnp.maximum(y, 0.0)
    if sigmoid_output:
        y = jax.nn.sigmoid(y)
    o_ref[...] = y.astype(o_ref.dtype)


class MLPPallas:
    """JAX/Pallas re-implementation of the PyTorch MLP module (fused kernel).

    param_dtype: dtype of stored weights / matmul operands.  Use jnp.bfloat16
    on v6e/v7x for larger layers (MXU-native, halves weight DMA/VMEM); f32
    accumulation is kept either way.
    """

    def __init__(self, input_dim, hidden_dim, output_dim, num_layers,
                 sigmoid_output=False, key=None, param_dtype=jnp.float32):
        self.num_layers = num_layers
        self.sigmoid_output = sigmoid_output
        self.input_dim = input_dim
        self.output_dim = output_dim
        self.param_dtype = jnp.dtype(param_dtype)

        h = [hidden_dim] * (num_layers - 1)
        self._dims = list(zip([input_dim] + h, h + [output_dim]))

        if key is None:
            key = jax.random.PRNGKey(0)

        self.weights = []       # unpadded (in, out) f32, reference path
        self.biases = []        # unpadded (out,) f32
        self.weights_pad = []   # (K_i, N_i_pad) in param_dtype
        self.biases_pad = []    # (1, N_i_pad) f32
        for li, (n_in, n_out) in enumerate(self._dims):
            key, wk, bk = jax.random.split(key, 3)
            # PyTorch nn.Linear default init: U(-1/sqrt(fan_in), 1/sqrt(fan_in))
            bound = 1.0 / math.sqrt(n_in)
            w = jax.random.uniform(wk, (n_in, n_out), jnp.float32, -bound, bound)
            b = jax.random.uniform(bk, (n_out,), jnp.float32, -bound, bound)
            self.weights.append(w)
            self.biases.append(b)

            # First layer keeps its K (= input_dim) unpadded: the activation
            # block's last dim equals the full array dim (legal BlockSpec) and
            # the x HBM read shrinks 4x.  Later layers' K must match the
            # lane-padded width of the previous layer's output.
            kp = n_in if li == 0 else _round_up(n_in, LANE)
            np_ = _round_up(n_out, LANE)
            # Zero padding keeps padded lanes at exactly 0 through every ReLU
            # layer, so discarded lanes never contaminate the real output.
            wp = jnp.zeros((kp, np_), jnp.float32).at[:n_in, :n_out].set(w)
            bp = jnp.zeros((1, np_), jnp.float32).at[0, :n_out].set(b)
            self.weights_pad.append(wp.astype(self.param_dtype))
            self.biases_pad.append(bp)  # bias stays f32 (added post-accumulate)

        self.out_dim_pad = self.weights_pad[-1].shape[1]

        # One jit over the whole forward: pad + pallas_call + slice + reshape
        # fuse, and per-call Python dispatch overhead disappears.
        self._forward = jax.jit(self._forward_impl)

    def __call__(self, x):
        return self._forward(x, tuple(self.weights_pad), tuple(self.biases_pad))

    def _forward_impl(self, x, weights, biases):
        orig_shape = x.shape
        in_dim = orig_shape[-1]
        x2 = x.reshape(-1, in_dim).astype(jnp.float32)
        M = x2.shape[0]

        tm, num_blocks = _choose_row_tiling(M)
        M_pad = tm * num_blocks
        xp = x2 if M_pad == M else jnp.pad(x2, ((0, M_pad - M), (0, 0)))

        K0 = in_dim
        NL = self.out_dim_pad

        in_specs = [pl.BlockSpec((tm, K0), lambda i: (i, 0))]
        params_flat = []
        for w, b in zip(weights, biases):
            kp, np_ = w.shape
            # Constant block index -> weights/biases stay VMEM-resident across
            # the row grid (no re-DMA per step).
            in_specs.append(pl.BlockSpec((kp, np_), lambda i: (0, 0)))
            in_specs.append(pl.BlockSpec((1, np_), lambda i: (0, 0)))
            params_flat += [w, b]
        # Output stays lane-dense (NL multiple of 128) -> unmasked vst; the
        # wrapper slice below is fused under jit instead of a standalone copy.
        out_specs = pl.BlockSpec((tm, NL), lambda i: (i, 0))

        # Advisory cost from UNPADDED shapes (padded shapes overstate ~16x).
        flops = 2 * M * sum(ni * no for ni, no in self._dims)
        transcendentals = M * self.output_dim if self.sigmoid_output else 0
        bytes_accessed = 4 * M * (in_dim + self.output_dim) + sum(
            ni * no * self.param_dtype.itemsize + no * 4
            for ni, no in self._dims)

        # VMEM budget: double-buffered x/out row tiles + resident params +
        # headroom for live activations.  If hidden_dim ever scales up, the
        # next knob is pl.Buffered(1) on the grid-invariant weight specs.
        max_np = max(w.shape[1] for w in weights)
        need = 2 * 4 * tm * (K0 + NL)
        need += 2 * sum(w.size * w.dtype.itemsize + b.size * b.dtype.itemsize
                        for w, b in zip(weights, biases))
        need += 4 * tm * max_np * (self.num_layers + 1)
        vmem_limit = int(min(48 * 2**20, max(32 * 2**20, 2 * need)))

        kernel = functools.partial(_fused_mlp_kernel,
                                   num_layers=self.num_layers,
                                   sigmoid_output=self.sigmoid_output,
                                   compute_dtype=self.param_dtype)

        out_pad = pl.pallas_call(
            kernel,
            out_shape=jax.ShapeDtypeStruct((M_pad, NL), jnp.float32),
            grid=(num_blocks,),
            in_specs=in_specs,
            out_specs=out_specs,
            compiler_params=pltpu.CompilerParams(
                dimension_semantics=("parallel",),
                vmem_limit_bytes=vmem_limit),
            cost_estimate=pl.CostEstimate(
                flops=flops,
                transcendentals=transcendentals,
                bytes_accessed=bytes_accessed),
        )(xp, *params_flat)

        out = out_pad[:M, :self.output_dim]
        return out.reshape(*orig_shape[:-1], self.output_dim)

    # pure-JAX reference for correctness checking
    def reference(self, x):
        orig_shape = x.shape
        x2 = x.reshape(-1, orig_shape[-1]).astype(jnp.float32)
        for i, (w, b) in enumerate(zip(self.weights, self.biases)):
            x2 = x2 @ w + b
            if i < self.num_layers - 1:
                x2 = jnp.maximum(x2, 0.0)
        if self.sigmoid_output:
            x2 = jax.nn.sigmoid(x2)
        return x2.reshape(*orig_shape[:-1], self.output_dim)


if __name__ == "__main__":
    key = jax.random.PRNGKey(0)
    key, pk, xk1, xk2, xk3 = jax.random.split(key, 5)

    # Shapes consistent with the MLP usage in the mask decoder:
    # tokens of dim `input_dim`, batch x seq leading dims.
    batch, seq = 2, 8
    input_dim, hidden_dim, output_dim, num_layers = 32, 32, 16, 3

    mlp = MLPPallas(input_dim, hidden_dim, output_dim, num_layers,
                    sigmoid_output=True, key=pk)

    # 1) Small M -> single row block.
    x = jax.random.normal(xk1, (batch, seq, input_dim), jnp.float32)
    out = jax.block_until_ready(mlp(x))
    ref = mlp.reference(x)
    assert out.shape == (batch, seq, output_dim)
    assert jnp.allclose(out, ref, atol=1e-5, rtol=1e-5), "mismatch (small M)"

    # 2) Non-aligned M=300 -> still a single 304-row block (no 41% row waste).
    x2 = jax.random.normal(xk2, (3, 100, input_dim), jnp.float32)
    out2 = jax.block_until_ready(mlp(x2))
    ref2 = mlp.reference(x2)
    assert out2.shape == (3, 100, output_dim)
    assert jnp.allclose(out2, ref2, atol=1e-5, rtol=1e-5), "mismatch (M=300)"

    # 3) Larger M=750 -> two balanced row blocks on the "parallel" grid axis.
    x3 = jax.random.normal(xk3, (3, 250, input_dim), jnp.float32)
    out3 = jax.block_until_ready(mlp(x3))
    ref3 = mlp.reference(x3)
    assert out3.shape == (3, 250, output_dim)
    assert jnp.allclose(out3, ref3, atol=1e-5, rtol=1e-5), "mismatch (M=750)"

    # 4) bf16 weights / matmul operands (v6e/v7x MXU-native path), f32 accum.
    mlp_bf16 = MLPPallas(input_dim, hidden_dim, output_dim, num_layers,
                         sigmoid_output=True, key=pk,
                         param_dtype=jnp.bfloat16)
    out_bf = jax.block_until_ready(mlp_bf16(x))
    ref_bf = mlp_bf16.reference(x)
    assert out_bf.shape == (batch, seq, output_dim)
    assert jnp.allclose(out_bf, ref_bf, atol=5e-2, rtol=5e-2), "mismatch (bf16)"

    print("KERNEL_OK")
</pallas_src>

<mosaic_0001>
module attributes {stable_mosaic.version = 11 : i64} {
  func.func @_fused_mlp_kernel(%arg0: i32, %arg1: memref<16x32xf32, #tpu.memory_space<vmem>>, %arg2: memref<32x128xf32, #tpu.memory_space<vmem>>, %arg3: memref<1x128xf32, #tpu.memory_space<vmem>>, %arg4: memref<128x128xf32, #tpu.memory_space<vmem>>, %arg5: memref<1x128xf32, #tpu.memory_space<vmem>>, %arg6: memref<128x128xf32, #tpu.memory_space<vmem>>, %arg7: memref<1x128xf32, #tpu.memory_space<vmem>>, %arg8: memref<16x128xf32, #tpu.memory_space<vmem>>) attributes {dimension_semantics = [#tpu.dimension_semantics<parallel>], iteration_bounds = array<i64: 1>, scalar_prefetch = 0 : i64, scratch_operands = 0 : i64, tpu.core_type = #tpu.core_type<tc>, window_params = [{transform_indices = @transform_0, window_bounds = array<i64: 16, 32>}, {pipeline_mode = #tpu.pipeline_mode<synchronous>, transform_indices = @transform_1, window_bounds = array<i64: 32, 128>}, {pipeline_mode = #tpu.pipeline_mode<synchronous>, transform_indices = @transform_2, window_bounds = array<i64: 1, 128>}, {pipeline_mode = #tpu.pipeline_mode<synchronous>, transform_indices = @transform_3, window_bounds = array<i64: 128, 128>}, {pipeline_mode = #tpu.pipeline_mode<synchronous>, transform_indices = @transform_4, window_bounds = array<i64: 1, 128>}, {pipeline_mode = #tpu.pipeline_mode<synchronous>, transform_indices = @transform_5, window_bounds = array<i64: 128, 128>}, {pipeline_mode = #tpu.pipeline_mode<synchronous>, transform_indices = @transform_6, window_bounds = array<i64: 1, 128>}, {transform_indices = @transform_7, window_bounds = array<i64: 16, 128>}]} {
    %c0 = arith.constant 0 : index
    %c0_0 = arith.constant 0 : index
    %0 = vector.load %arg1[%c0, %c0_0] : memref<16x32xf32, #tpu.memory_space<vmem>>, vector<16x32xf32>
    %c0_1 = arith.constant 0 : index
    %c0_2 = arith.constant 0 : index
    %1 = vector.load %arg2[%c0_1, %c0_2] : memref<32x128xf32, #tpu.memory_space<vmem>>, vector<32x128xf32>
    %c0_3 = arith.constant 0 : index
    %c0_4 = arith.constant 0 : index
    %2 = vector.load %arg3[%c0_3, %c0_4] : memref<1x128xf32, #tpu.memory_space<vmem>>, vector<1x128xf32>
    %cst = arith.constant dense<0.000000e+00> : vector<16x128xf32>
    %3 = tpu.matmul %0, %1, %cst {dimension_numbers = #tpu.dot_dimension_numbers<[1], [0], [0], [1], [0, 0, 1, 1], [], []>} : vector<16x32xf32>, vector<32x128xf32>, vector<16x128xf32> -> vector<16x128xf32>
    %4 = vector.broadcast %2 : vector<1x128xf32> to vector<16x128xf32>
    %5 = arith.addf %3, %4 : vector<16x128xf32>
    %cst_5 = arith.constant 0.000000e+00 : f32
    %6 = vector.broadcast %cst_5 : f32 to vector<16x128xf32>
    %7 = arith.maximumf %5, %6 : vector<16x128xf32>
    %c0_6 = arith.constant 0 : index
    %c0_7 = arith.constant 0 : index
    %8 = vector.load %arg4[%c0_6, %c0_7] : memref<128x128xf32, #tpu.memory_space<vmem>>, vector<128x128xf32>
    %c0_8 = arith.constant 0 : index
    %c0_9 = arith.constant 0 : index
    %9 = vector.load %arg5[%c0_8, %c0_9] : memref<1x128xf32, #tpu.memory_space<vmem>>, vector<1x128xf32>
    %cst_10 = arith.constant dense<0.000000e+00> : vector<16x128xf32>
    %10 = tpu.matmul %7, %8, %cst_10 {dimension_numbers = #tpu.dot_dimension_numbers<[1], [0], [0], [1], [0, 0, 1, 1], [], []>} : vector<16x128xf32>, vector<128x128xf32>, vector<16x128xf32> -> vector<16x128xf32>
    %11 = vector.broadcast %9 : vector<1x128xf32> to vector<16x128xf32>
    %12 = arith.addf %10, %11 : vector<16x128xf32>
    %cst_11 = arith.constant 0.000000e+00 : f32
    %13 = vector.broadcast %cst_11 : f32 to vector<16x128xf32>
    %14 = arith.maximumf %12, %13 : vector<16x128xf32>
    %c0_12 = arith.constant 0 : index
    %c0_13 = arith.constant 0 : index
    %15 = vector.load %arg6[%c0_12, %c0_13] : memref<128x128xf32, #tpu.memory_space<vmem>>, vector<128x128xf32>
    %c0_14 = arith.constant 0 : index
    %c0_15 = arith.constant 0 : index
    %16 = vector.load %arg7[%c0_14, %c0_15] : memref<1x128xf32, #tpu.memory_space<vmem>>, vector<1x128xf32>
    %cst_16 = arith.constant dense<0.000000e+00> : vector<16x128xf32>
    %17 = tpu.matmul %14, %15, %cst_16 {dimension_numbers = #tpu.dot_dimension_numbers<[1], [0], [0], [1], [0, 0, 1, 1], [], []>} : vector<16x128xf32>, vector<128x128xf32>, vector<16x128xf32> -> vector<16x128xf32>
    %18 = vector.broadcast %16 : vector<1x128xf32> to vector<16x128xf32>
    %19 = arith.addf %17, %18 : vector<16x128xf32>
    %20 = arith.negf %19 : vector<16x128xf32>
    %21 = math.exp %20 : vector<16x128xf32>
    %cst_17 = arith.constant 1.000000e+00 : f32
    %22 = vector.broadcast %cst_17 : f32 to vector<16x128xf32>
    %23 = arith.addf %22, %21 : vector<16x128xf32>
    %24 = arith.divf %22, %23 : vector<16x128xf32>
    %c0_18 = arith.constant 0 : index
    %c0_19 = arith.constant 0 : index
    %25 = vector.load %arg8[%c0_18, %c0_19] : memref<16x128xf32, #tpu.memory_space<vmem>>, vector<16x128xf32>
    tpu.vector_store %arg8[%c0_18, %c0_19], %24 {strides = array<i32>} : memref<16x128xf32, #tpu.memory_space<vmem>>, vector<16x128xf32>,
    return
  }
  func.func @transform_0(%arg0: i32) -> (i32, i32) {
    %c0_i32 = arith.constant 0 : i32
    %c0_i32_0 = arith.constant 0 : i32
    return %arg0, %c0_i32 : i32, i32
  }
  func.func @transform_1(%arg0: i32) -> (i32, i32) {
    %c0_i32 = arith.constant 0 : i32
    %c0_i32_0 = arith.constant 0 : i32
    %c0_i32_1 = arith.constant 0 : i32
    return %c0_i32, %c0_i32_0 : i32, i32
  }
  func.func @transform_2(%arg0: i32) -> (i32, i32) {
    %c0_i32 = arith.constant 0 : i32
    %c0_i32_0 = arith.constant 0 : i32
    %c0_i32_1 = arith.constant 0 : i32
    return %c0_i32, %c0_i32_0 : i32, i32
  }
  func.func @transform_3(%arg0: i32) -> (i32, i32) {
    %c0_i32 = arith.constant 0 : i32
    %c0_i32_0 = arith.constant 0 : i32
    %c0_i32_1 = arith.constant 0 : i32
    return %c0_i32, %c0_i32_0 : i32, i32
  }
  func.func @transform_4(%arg0: i32) -> (i32, i32) {
    %c0_i32 = arith.constant 0 : i32
    %c0_i32_0 = arith.constant 0 : i32
    %c0_i32_1 = arith.constant 0 : i32
    return %c0_i32, %c0_i32_0 : i32, i32
  }
  func.func @transform_5(%arg0: i32) -> (i32, i32) {
    %c0_i32 = arith.constant 0 : i32
    %c0_i32_0 = arith.constant 0 : i32
    %c0_i32_1 = arith.constant 0 : i32
    return %c0_i32, %c0_i32_0 : i32, i32
  }
  func.func @transform_6(%arg0: i32) -> (i32, i32) {
    %c0_i32 = arith.constant 0 : i32
    %c0_i32_0 = arith.constant 0 : i32
    %c0_i32_1 = arith.constant 0 : i32
    return %c0_i32, %c0_i32_0 : i32, i32
  }
  func.func @transform_7(%arg0: i32) -> (i32, i32) {
    %c0_i32 = arith.constant 0 : i32
    %c0_i32_0 = arith.constant 0 : i32
    return %arg0, %c0_i32 : i32, i32
  }
}

</mosaic_0001>

<llo_original>
// kernel: _forward_impl.1
$region0: #{_forward_impl.1}
  #allocation0 [shape = 'u32[]', space=smem, size = 0x4, offset = 0x4, fixed_abs, tag = 'smem constant byte address 0x4 - core index']
  #allocation1 [shape = 'u32[72,128]{1,0:T(1,128)}', space=vmem, size = 0x9000, scoped, tag = 'internal scratch']
  %s0 = inlined_call_operand.hbm [shape: f32[16,32], index: 0, kind: input, shape index: {}]
  %s1 = inlined_call_operand.hbm [shape: f32[32,128], index: 1, kind: input, shape index: {}]
  %s2 = inlined_call_operand.vmem [shape: f32[1,128], index: 2, kind: input, shape index: {}]
  %s3 = inlined_call_operand.hbm [shape: f32[128,128], index: 3, kind: input, shape index: {}]
  %s4 = inlined_call_operand.vmem [shape: f32[1,128], index: 4, kind: input, shape index: {}]
  %s5 = inlined_call_operand.hbm [shape: f32[128,128], index: 5, kind: input, shape index: {}]
  %s6 = inlined_call_operand.vmem [shape: f32[1,128], index: 6, kind: input, shape index: {}]
  %s7 = inlined_call_operand.vmem [shape: f32[16,128], index: 7, kind: output, shape index: {}]
  %s8 = sld [smem:[#allocation0]]
  $region54: #{_forward_impl.1} parent=0
    _
  %s10 = ssub.s32 1, %s8
  %s11 = scalar_select 0, %s10, %s8
  $region1: #{_forward_impl.1} parent=0
    #allocation2 [shape = 'u8[8192]{0}', space=vmem, size = 0x2000, scoped, tag = 'input window, operand 0, single buffered']
    #allocation3 [shape = 's32[1]{0}', space=sflag, size = 0x4, scoped, tag = 'scoped memory for _forward_impl.1']
    #allocation4 [shape = 'u8[16384]{0}', space=vmem, size = 0x4000, scoped, tag = 'input window, operand 1, single buffered']
    #allocation5 [shape = 's32[1]{0}', space=sflag, size = 0x4, scoped, tag = 'scoped memory for _forward_impl.1']
    #allocation6 [shape = 'u8[65536]{0}', space=vmem, size = 0x10000, scoped, tag = 'input window, operand 3, single buffered']
    #allocation7 [shape = 'u8[65536]{0}', space=vmem, size = 0x10000, scoped, tag = 'input window, operand 5, single buffered']
    #allocation8 [shape = 's32[1]{0}', space=sflag, size = 0x4, scoped, tag = 'scoped memory for _forward_impl.1']
    %12 = vsyncpa [#allocation3], 0
    %13 = vsyncpa [#allocation5], 0
    %14 = vsyncpa [#allocation8], 0
    // Predicated region
    $region2: #{_forward_impl.1} parent=1 // pred_check
      _
    $region3: #{_forward_impl.1} parent=1 // pred_check_branch
      %16 = sbr.rel (0) target = $region5
    $region4: #{_forward_impl.1} parent=1 // pred_region
      %18 = vsyncadd [#allocation3], 0
      %s19 = sshll.u32 %s0, 4
      %s20 = int_to_ptr.hbm [resolvable:$true] %s19
      %s21 = sshll.u32 [#allocation2], 4
      %s22 = int_to_ptr.vmem [resolvable:$true] %s21
      %27 = dma.hbm_to_vmem [thread:$0]  %s20, 256, %s22, [#allocation3], 128, 128, 8
    $region5: #{_forward_impl.1} parent=1 // pred_fallthru
      _
    // Predicated region
    $region6: #{_forward_impl.1} parent=1 // pred_check
      _
    $region7: #{_forward_impl.1} parent=1 // pred_check_branch
      %29 = sbr.rel (0) target = $region9
    $region8: #{_forward_impl.1} parent=1 // pred_region
      %31 = vsyncadd [#allocation5], 0
      %s32 = sshll.u32 %s1, 4
      %s33 = int_to_ptr.hbm [resolvable:$true] %s32
      %s34 = sshll.u32 [#allocation4], 4
      %s35 = int_to_ptr.vmem [resolvable:$true] %s34
      %40 = dma.hbm_to_vmem [thread:$0]  %s33, 512, %s35, [#allocation5], 128, 128, 8
    $region9: #{_forward_impl.1} parent=1 // pred_fallthru
      _
    // Predicated region
    $region10: #{_forward_impl.1} parent=1 // pred_check
      _
    $region11: #{_forward_impl.1} parent=1 // pred_check_branch
      %42 = sbr.rel (0) target = $region13
    $region12: #{_forward_impl.1} parent=1 // pred_region
      _
    $region13: #{_forward_impl.1} parent=1 // pred_fallthru
      _
    // Predicated region
    $region14: #{_forward_impl.1} parent=1 // pred_check
      _
    $region15: #{_forward_impl.1} parent=1 // pred_check_branch
      %44 = sbr.rel (0) target = $region17
    $region16: #{_forward_impl.1} parent=1 // pred_region
      %46 = vsyncadd [#allocation5], 0
      %s47 = sshll.u32 %s3, 4
      %s48 = int_to_ptr.hbm [resolvable:$true] %s47
      %s49 = sshll.u32 [#allocation6], 4
      %s50 = int_to_ptr.vmem [resolvable:$true] %s49
      %55 = dma.hbm_to_vmem [thread:$0]  %s48, 2048, %s50, [#allocation5], 128, 128, 8
    $region17: #{_forward_impl.1} parent=1 // pred_fallthru
      _
    // Predicated region
    $region18: #{_forward_impl.1} parent=1 // pred_check
      _
    $region19: #{_forward_impl.1} parent=1 // pred_check_branch
      %57 = sbr.rel (0) target = $region21
    $region20: #{_forward_impl.1} parent=1 // pred_region
      _
    $region21: #{_forward_impl.1} parent=1 // pred_fallthru
      _
    // Predicated region
    $region22: #{_forward_impl.1} parent=1 // pred_check
      _
    $region23: #{_forward_impl.1} parent=1 // pred_check_branch
      %59 = sbr.rel (0) target = $region25
    $region24: #{_forward_impl.1} parent=1 // pred_region
      %61 = vsyncadd [#allocation8], 0
      %s62 = sshll.u32 %s5, 4
      %s63 = int_to_ptr.hbm [resolvable:$true] %s62
      %s64 = sshll.u32 [#allocation7], 4
      %s65 = int_to_ptr.vmem [resolvable:$true] %s64
      %70 = dma.hbm_to_vmem [thread:$0]  %s63, 2048, %s65, [#allocation8], 128, 128, 8
    $region25: #{_forward_impl.1} parent=1 // pred_fallthru
      _
    // Predicated region
    $region26: #{_forward_impl.1} parent=1 // pred_check
      _
    $region27: #{_forward_impl.1} parent=1 // pred_check_branch
      %72 = sbr.rel (0) target = $region29
    $region28: #{_forward_impl.1} parent=1 // pred_region
      _
    $region29: #{_forward_impl.1} parent=1 // pred_fallthru
      _
    // Predicated region
    $region30: #{_forward_impl.1} parent=1 // pred_check
      _
    $region31: #{_forward_impl.1} parent=1 // pred_check_branch
      %74 = sbr.rel (0) target = $region33
    $region32: #{_forward_impl.1} parent=1 // pred_region
      %76 = dma.done [#allocation3], 256
    $region33: #{_forward_impl.1} parent=1 // pred_fallthru
      _
    // Predicated region
    $region34: #{_forward_impl.1} parent=1 // pred_check
      _
    $region35: #{_forward_impl.1} parent=1 // pred_check_branch
      %78 = sbr.rel (0) target = $region37
    $region36: #{_forward_impl.1} parent=1 // pred_region
      %80 = dma.done [#allocation5], 512
    $region37: #{_forward_impl.1} parent=1 // pred_fallthru
      _
    // Predicated region
    $region38: #{_forward_impl.1} parent=1 // pred_check
      _
    $region39: #{_forward_impl.1} parent=1 // pred_check_branch
      %82 = sbr.rel (0) target = $region41
    $region40: #{_forward_impl.1} parent=1 // pred_region
      %84 = dma.done [#allocation5], 2048
    $region41: #{_forward_impl.1} parent=1 // pred_fallthru
      _
    // Predicated region
    $region42: #{_forward_impl.1} parent=1 // pred_check
      _
    $region43: #{_forward_impl.1} parent=1 // pred_check_branch
      %86 = sbr.rel (0) target = $region45
    $region44: #{_forward_impl.1} parent=1 // pred_region
      %88 = dma.done [#allocation8], 2048
    $region45: #{_forward_impl.1} parent=1 // pred_fallthru
      _
    %v89 = vld [vmem:[#allocation2] sm:$0xff]
    %v90 = vld [vmem:[#allocation2 + $0x8] sm:$0xff]
    %v91 = vld [vmem:[#allocation4] sm:$0xff]
    %v92 = vld [vmem:[#allocation4 + $0x8] sm:$0xff]
    %v93 = vld [vmem:[#allocation4 + $0x10] sm:$0xff]
    %v94 = vld [vmem:[#allocation4 + $0x18] sm:$0xff]
    %v95 = vld [vmem:[%s2] sm:$0x1]
    %v97 = vperm.slane %v95, 0
    %vm99 = vcmask 261120
    %v101 = vsel %vm99, %v89, 0
    %v104 = vsel %vm99, %v90, 0
    %106 = vmatpush.msra.mxu0 0.0
    %107 = vmatpush.msra.mxu0 0.0
    %108 = vmatpush.msra.mxu0 0.0
    %109 = vmatpush.msra.mxu0 0.0
    %110 = vmatpush.msra.mxu0 0.0
    %111 = vmatpush.msra.mxu0 0.0
    %112 = vmatpush.msra.mxu0 0.0
    %113 = vmatpush.msra.mxu0 0.0
    %114 = vmatpush.msra.mxu0 0.0
    %115 = vmatpush.msra.mxu0 0.0
    %116 = vmatpush.msra.mxu0 0.0
    %117 = vmatpush.msra.mxu0 0.0
    %118 = vmatpush.msra.mxu0 %v94
    %119 = vmatpush.msra.mxu0 %v93
    %120 = vmatpush.msra.mxu0 %v92
    %121 = vmatpush.msra.mxu0 %v91
    %122 = vmatmul.f32.gmra.mxu0 %v101
    %v123 = vpop.f32.mrf.mxu0
    %v124 = vadd.f32 %v97, %v123
    %125 = vmatmul.f32.gmra.mxu0 %v104
    %v126 = vpop.f32.mrf.mxu0
    %v127 = vadd.f32 %v97, %v126
    %128 = vdwg.mxu0
    %v129 = vmax.f32 %v124, 0.0
    %v130 = vmax.f32 %v127, 0.0
    %v131 = vld [vmem:[#allocation6] sm:$0xff]
    %v132 = vld [vmem:[#allocation6 + $0x8] sm:$0xff]
    %v133 = vld [vmem:[#allocation6 + $0x10] sm:$0xff]
    %v134 = vld [vmem:[#allocation6 + $0x18] sm:$0xff]
    %v135 = vld [vmem:[#allocation6 + $0x20] sm:$0xff]
    %v136 = vld [vmem:[#allocation6 + $0x28] sm:$0xff]
    %v137 = vld [vmem:[#allocation6 + $0x30] sm:$0xff]
    %v138 = vld [vmem:[#allocation6 + $0x38] sm:$0xff]
    %v139 = vld [vmem:[#allocation6 + $0x40] sm:$0xff]
    %v140 = vld [vmem:[#allocation6 + $0x48] sm:$0xff]
    %v141 = vld [vmem:[#allocation6 + $0x50] sm:$0xff]
    %v142 = vld [vmem:[#allocation6 + $0x58] sm:$0xff]
    %v143 = vld [vmem:[#allocation6 + $0x60] sm:$0xff]
    %v144 = vld [vmem:[#allocation6 + $0x68] sm:$0xff]
    %v145 = vld [vmem:[#allocation6 + $0x70] sm:$0xff]
    %v146 = vld [vmem:[#allocation6 + $0x78] sm:$0xff]
    %v147 = vld [vmem:[%s4] sm:$0x1]
    %v149 = vperm.slane %v147, 0
    %151 = vmatpush.msra.mxu0 %v146
    %152 = vmatpush.msra.mxu0 %v145
    %153 = vmatpush.msra.mxu0 %v144
    %154 = vmatpush.msra.mxu0 %v143
    %155 = vmatpush.msra.mxu0 %v142
    %156 = vmatpush.msra.mxu0 %v141
    %157 = vmatpush.msra.mxu0 %v140
    %158 = vmatpush.msra.mxu0 %v139
    %159 = vmatpush.msra.mxu0 %v138
    %160 = vmatpush.msra.mxu0 %v137
    %161 = vmatpush.msra.mxu0 %v136
    %162 = vmatpush.msra.mxu0 %v135
    %163 = vmatpush.msra.mxu0 %v134
    %164 = vmatpush.msra.mxu0 %v133
    %165 = vmatpush.msra.mxu0 %v132
    %166 = vmatpush.msra.mxu0 %v131
    %167 = vmatmul.f32.gmra.mxu0 %v129
    %v168 = vpop.f32.mrf.mxu0
    %v169 = vadd.f32 %v149, %v168
    %170 = vmatmul.f32.gmra.mxu0 %v130
    %v171 = vpop.f32.mrf.mxu0
    %v172 = vadd.f32 %v149, %v171
    %173 = vdwg.mxu0
    %v174 = vmax.f32 %v169, 0.0
    %v175 = vmax.f32 %v172, 0.0
    %v176 = vld [vmem:[#allocation7] sm:$0xff]
    %v177 = vld [vmem:[#allocation7 + $0x8] sm:$0xff]
    %v178 = vld [vmem:[#allocation7 + $0x10] sm:$0xff]
    %v179 = vld [vmem:[#allocation7 + $0x18] sm:$0xff]
    %v180 = vld [vmem:[#allocation7 + $0x20] sm:$0xff]
    %v181 = vld [vmem:[#allocation7 + $0x28] sm:$0xff]
    %v182 = vld [vmem:[#allocation7 + $0x30] sm:$0xff]
    %v183 = vld [vmem:[#allocation7 + $0x38] sm:$0xff]
    %v184 = vld [vmem:[#allocation7 + $0x40] sm:$0xff]
    %v185 = vld [vmem:[#allocation7 + $0x48] sm:$0xff]
    %v186 = vld [vmem:[#allocation7 + $0x50] sm:$0xff]
    %v187 = vld [vmem:[#allocation7 + $0x58] sm:$0xff]
    %v188 = vld [vmem:[#allocation7 + $0x60] sm:$0xff]
    %v189 = vld [vmem:[#allocation7 + $0x68] sm:$0xff]
    %v190 = vld [vmem:[#allocation7 + $0x70] sm:$0xff]
    %v191 = vld [vmem:[#allocation7 + $0x78] sm:$0xff]
    %v192 = vld [vmem:[%s6] sm:$0x1]
    %v194 = vperm.slane %v192, 0
    %196 = vmatpush.msra.mxu0 %v191
    %197 = vmatpush.msra.mxu0 %v190
    %198 = vmatpush.msra.mxu0 %v189
    %199 = vmatpush.msra.mxu0 %v188
    %200 = vmatpush.msra.mxu0 %v187
    %201 = vmatpush.msra.mxu0 %v186
    %202 = vmatpush.msra.mxu0 %v185
    %203 = vmatpush.msra.mxu0 %v184
    %204 = vmatpush.msra.mxu0 %v183
    %205 = vmatpush.msra.mxu0 %v182
    %206 = vmatpush.msra.mxu0 %v181
    %207 = vmatpush.msra.mxu0 %v180
    %208 = vmatpush.msra.mxu0 %v179
    %209 = vmatpush.msra.mxu0 %v178
    %210 = vmatpush.msra.mxu0 %v177
    %211 = vmatpush.msra.mxu0 %v176
    %212 = vmatmul.f32.gmra.mxu0 %v174
    %v213 = vpop.f32.mrf.mxu0
    %v214 = vadd.f32 %v194, %v213
    %215 = vmatmul.f32.gmra.mxu0 %v175
    %v216 = vpop.f32.mrf.mxu0
    %v217 = vadd.f32 %v194, %v216
    %218 = vdwg.mxu0
    %v219 = vxor.u32 %v214, 2147483648
    %v220 = vxor.u32 %v217, 2147483648
    %v221 = vmul.f32 %v219, 1.442695
    %v222 = vpow.pop %v221
    %v223 = vmul.f32 %v220, 1.442695
    %v224 = vpow.pop %v223
    %v225 = vadd.f32 %v222, 1.0
    %v226 = vadd.f32 %v224, 1.0
    %v227 = vrcp.pop %v225
    %v228 = vmul.f32 %v225, %v227
    %v229 = vsub.f32 1.0, %v228
    %v230 = vmul.f32 %v227, %v229
    %v231 = vadd.f32 %v227, %v230
    %vm232 = vweird.f32 %v225
    %vm233 = vweird.f32 %v227
    %vm234 = vmor %vm232, %vm233
    %v235 = vsel %vm234, %v227, %v231
    %v236 = vand.u32 2147483647, %v225
    %vm237 = vcmp.eq.f32.partialorder %v236, 8.507059e+37
    %v238 = vand.u32 %v225, 2147483648
    %v239 = vor.u32 1.1754944e-38, %v238
    %v240 = vsel %vm237, %v239, %v235
    %v241 = vmul.f32 1.0, %v240
    %v242 = vrcp.pop %v226
    %v243 = vmul.f32 %v226, %v242
    %v244 = vsub.f32 1.0, %v243
    %v245 = vmul.f32 %v242, %v244
    %v246 = vadd.f32 %v242, %v245
    %vm247 = vweird.f32 %v226
    %vm248 = vweird.f32 %v242
    %vm249 = vmor %vm247, %vm248
    %v250 = vsel %vm249, %v242, %v246
    %v251 = vand.u32 2147483647, %v226
    %vm252 = vcmp.eq.f32.partialorder %v251, 8.507059e+37
    %v253 = vand.u32 %v226, 2147483648
    %v254 = vor.u32 1.1754944e-38, %v253
    %v255 = vsel %vm252, %v254, %v250
    %v256 = vmul.f32 1.0, %v255
    %257 = vst [vmem:[%s7] sm:$0xff] %v241
    %258 = vst [vmem:[%s7 + $0x8] sm:$0xff] %v256
    // Predicated region
    $region46: #{_forward_impl.1} parent=1 // pred_check
      _
    $region47: #{_forward_impl.1} parent=1 // pred_check_branch
      %260 = sbr.rel (0) target = $region49
    $region48: #{_forward_impl.1} parent=1 // pred_region
      _
    $region49: #{_forward_impl.1} parent=1 // pred_fallthru
      _
    // Predicated region
    $region50: #{_forward_impl.1} parent=1 // pred_check
      _
    $region51: #{_forward_impl.1} parent=1 // pred_check_branch
      %262 = sbr.rel (0) target = $region53
    $region52: #{_forward_impl.1} parent=1 // pred_region
      _
    $region53: #{_forward_impl.1} parent=1 // pred_fallthru
      _
    %263 = vsyncpa [#allocation3], 1
    %264 = vsyncpa [#allocation5], 1
    %265 = vsyncpa [#allocation8], 1

</llo_original>
